<compile_context>
chip_gen: v6e
topology: v6e:2x2x1
jax: 0.10.0
libtpu: 0.0.40
codegen_flags: <defaults>
</compile_context>

<pallas_src>
import jax
import jax.numpy as jnp
from jax.experimental import pallas as pl
from jax.experimental.pallas import tpu as pltpu


_LANE = 512            # lane-dense last dim (multiple of 128)
_MAX_TILE_ROWS = 1024  # 1024 * 512 * 4 B = 2 MiB per f32 buffer


def _round_up(x, m):
    return (x + m - 1) // m * m


def _adjust_gamma_kernel(gamma_ref, gain_ref, x_ref, o_ref):
    b = pl.program_id(0)
    gamma = gamma_ref[b]          # per-batch scalar from SMEM
    gain = gain_ref[b]            # per-batch scalar from SMEM

    x = x_ref[...]
    xf = x if x.dtype == jnp.float32 else x.astype(jnp.float32)

    @pl.when(gamma == 1.0)
    def _():
        # identity exponent: no transcendentals, just scale + clamp
        o_ref[...] = jnp.clip(gain * xf, 0.0, 1.0).astype(o_ref.dtype)

    @pl.when(gamma != 1.0)
    def _():
        # power-law transform + clamp (jnp.power keeps the 0**0 == 1 semantics)
        y = gain * jnp.power(xf, gamma)
        o_ref[...] = jnp.clip(y, 0.0, 1.0).astype(o_ref.dtype)


def adjust_gamma(image, gamma, gain=1.0):
    """image: float array of shape (B, C, H, W). gamma/gain: scalar or (B,)."""
    # TODO(synk): integer (uint8) image path (the /255 and *255 conversion
    # PyTorch performs for integer dtypes) is not implemented; float images in
    # [0, 1] are assumed (matches the tensor docstring examples).
    orig_shape = image.shape
    orig_dtype = image.dtype
    B = orig_shape[0]
    CHW = 1
    for d in orig_shape[1:]:
        CHW *= d

    gamma = jnp.broadcast_to(jnp.asarray(gamma, jnp.float32).reshape(-1), (B,))
    gain = jnp.broadcast_to(jnp.asarray(gain, jnp.float32).reshape(-1), (B,))

    # Lane-dense flattened layout: (B, rows_padded, 512).
    rows = pl.cdiv(CHW, _LANE)
    tile_rows = min(_MAX_TILE_ROWS, _round_up(rows, 8))
    rows_padded = _round_up(rows, tile_rows)
    padded_len = rows_padded * _LANE

    flat = image.reshape(B, CHW)
    if padded_len != CHW:
        # zero padding: pow/clip of 0 is well-defined, padded region is sliced off
        flat = jnp.pad(flat, ((0, 0), (0, padded_len - CHW)))
    x3 = flat.reshape(B, rows_padded, _LANE)

    grid = (B, rows_padded // tile_rows)

    n_elems = B * CHW
    cost = pl.CostEstimate(
        flops=3 * n_elems,
        transcendentals=2 * n_elems,
        bytes_accessed=2 * n_elems * image.dtype.itemsize,
    )

    out3 = pl.pallas_call(
        _adjust_gamma_kernel,
        out_shape=jax.ShapeDtypeStruct((B, rows_padded, _LANE), orig_dtype),
        grid_spec=pl.GridSpec(
            grid=grid,
            in_specs=[
                pl.BlockSpec(memory_space=pltpu.MemorySpace.SMEM),   # gamma (B,)
                pl.BlockSpec(memory_space=pltpu.MemorySpace.SMEM),   # gain  (B,)
                pl.BlockSpec((1, tile_rows, _LANE), lambda b, r: (b, r, 0)),
            ],
            out_specs=pl.BlockSpec((1, tile_rows, _LANE), lambda b, r: (b, r, 0)),
        ),
        compiler_params=pltpu.CompilerParams(
            dimension_semantics=("parallel", "parallel"),
        ),
        cost_estimate=cost,
    )(gamma, gain, x3)

    out = out3.reshape(B, padded_len)
    if padded_len != CHW:
        out = out[:, :CHW]
    return out.reshape(orig_shape)


class AdjustGamma:
    """Mirror of the PyTorch module's constructor/forward interface."""

    def __init__(self, gamma, gain=1.0):
        self.gamma = gamma
        self.gain = gain

    def __call__(self, image):
        return adjust_gamma(image, self.gamma, self.gain)


if __name__ == "__main__":
    key = jax.random.PRNGKey(0)
    B, C, H, W = 2, 4, 16, 16
    x = jax.random.uniform(key, (B, C, H, W), dtype=jnp.float32)

    # deterministic per-batch parameters (same convention as the 2nd docstring example)
    gamma = jnp.array([1.0, 2.0], dtype=jnp.float32)
    gain = jnp.array([2.0, 0.5], dtype=jnp.float32)

    mod = AdjustGamma(gamma, gain)
    y = jax.block_until_ready(mod(x))

    # reference in plain JAX
    y_ref = jnp.clip(
        gain[:, None, None, None] * jnp.power(x, gamma[:, None, None, None]),
        0.0, 1.0,
    )
    assert y.shape == x.shape and y.dtype == x.dtype
    assert jnp.allclose(y, y_ref, atol=1e-5, rtol=1e-5), "mismatch vs reference"

    # also exercise the scalar-parameter path
    y2 = jax.block_until_ready(AdjustGamma(2.2, 1.0)(x))
    y2_ref = jnp.clip(jnp.power(x, 2.2), 0.0, 1.0)
    assert jnp.allclose(y2, y2_ref, atol=1e-5, rtol=1e-5), "mismatch (scalar params)"

    print("KERNEL_OK")
</pallas_src>

<mosaic_0001>
module attributes {stable_mosaic.version = 11 : i64} {
  func.func @_adjust_gamma_kernel(%arg0: i32, %arg1: i32, %arg2: memref<2xf32, #tpu.memory_space<smem>>, %arg3: memref<2xf32, #tpu.memory_space<smem>>, %arg4: memref<1x8x512xf32, #tpu.memory_space<vmem>>, %arg5: memref<1x8x512xf32, #tpu.memory_space<vmem>>) attributes {dimension_semantics = [#tpu.dimension_semantics<parallel>, #tpu.dimension_semantics<parallel>], iteration_bounds = array<i64: 2, 1>, scalar_prefetch = 0 : i64, scratch_operands = 0 : i64, tpu.core_type = #tpu.core_type<tc>, window_params = [{transform_indices = @transform_0, window_bounds = array<i64: 2>}, {transform_indices = @transform_1, window_bounds = array<i64: 2>}, {transform_indices = @transform_2, window_bounds = array<i64: 1, 8, 512>}, {transform_indices = @transform_3, window_bounds = array<i64: 1, 8, 512>}]} {
    %0 = arith.index_cast %arg0 : i32 to index
    %1 = memref.load %arg2[%0] : memref<2xf32, #tpu.memory_space<smem>>
    %2 = arith.index_cast %arg0 : i32 to index
    %3 = memref.load %arg3[%2] : memref<2xf32, #tpu.memory_space<smem>>
    %c0 = arith.constant 0 : index
    %c0_0 = arith.constant 0 : index
    %c0_1 = arith.constant 0 : index
    %4 = vector.load %arg4[%c0, %c0_0, %c0_1] : memref<1x8x512xf32, #tpu.memory_space<vmem>>, vector<1x8x512xf32>
    %cst = arith.constant 1.000000e+00 : f32
    %5 = arith.cmpf oeq, %1, %cst : f32
    %6 = arith.extui %5 : i1 to i32
    %c0_i32 = arith.constant 0 : i32
    %7 = arith.cmpi ne, %6, %c0_i32 : i32
    scf.if %7 {
      %11 = vector.broadcast %3 : f32 to vector<1x8x512xf32>
      %12 = arith.mulf %11, %4 : vector<1x8x512xf32>
      %cst_4 = arith.constant 0.000000e+00 : f32
      %cst_5 = arith.constant 1.000000e+00 : f32
      %13 = vector.broadcast %cst_4 : f32 to vector<1x8x512xf32>
      %14 = arith.maximumf %13, %12 : vector<1x8x512xf32>
      %15 = vector.broadcast %cst_5 : f32 to vector<1x8x512xf32>
      %16 = arith.minimumf %15, %14 : vector<1x8x512xf32>
      %c0_6 = arith.constant 0 : index
      %c0_7 = arith.constant 0 : index
      %c0_8 = arith.constant 0 : index
      %17 = vector.load %arg5[%c0_6, %c0_7, %c0_8] : memref<1x8x512xf32, #tpu.memory_space<vmem>>, vector<1x8x512xf32>
      tpu.vector_store %arg5[%c0_6, %c0_7, %c0_8], %16 {strides = array<i32>} : memref<1x8x512xf32, #tpu.memory_space<vmem>>, vector<1x8x512xf32>,
    } else {
    }
    %cst_2 = arith.constant 1.000000e+00 : f32
    %8 = arith.cmpf one, %1, %cst_2 : f32
    %9 = arith.extui %8 : i1 to i32
    %c0_i32_3 = arith.constant 0 : i32
    %10 = arith.cmpi ne, %9, %c0_i32_3 : i32
    scf.if %10 {
      %11 = vector.broadcast %1 : f32 to vector<1x8x512xf32>
      %12 = math.powf %4, %11 : vector<1x8x512xf32>
      %13 = vector.broadcast %3 : f32 to vector<1x8x512xf32>
      %14 = arith.mulf %13, %12 : vector<1x8x512xf32>
      %cst_4 = arith.constant 0.000000e+00 : f32
      %cst_5 = arith.constant 1.000000e+00 : f32
      %15 = vector.broadcast %cst_4 : f32 to vector<1x8x512xf32>
      %16 = arith.maximumf %15, %14 : vector<1x8x512xf32>
      %17 = vector.broadcast %cst_5 : f32 to vector<1x8x512xf32>
      %18 = arith.minimumf %17, %16 : vector<1x8x512xf32>
      %c0_6 = arith.constant 0 : index
      %c0_7 = arith.constant 0 : index
      %c0_8 = arith.constant 0 : index
      %19 = vector.load %arg5[%c0_6, %c0_7, %c0_8] : memref<1x8x512xf32, #tpu.memory_space<vmem>>, vector<1x8x512xf32>
      tpu.vector_store %arg5[%c0_6, %c0_7, %c0_8], %18 {strides = array<i32>} : memref<1x8x512xf32, #tpu.memory_space<vmem>>, vector<1x8x512xf32>,
    } else {
    }
    return
  }
  func.func @transform_0(%arg0: i32, %arg1: i32) -> i32 {
    %c0_i32 = arith.constant 0 : i32
    %c0_i32_0 = arith.constant 0 : i32
    return %c0_i32 : i32
  }
  func.func @transform_1(%arg0: i32, %arg1: i32) -> i32 {
    %c0_i32 = arith.constant 0 : i32
    %c0_i32_0 = arith.constant 0 : i32
    return %c0_i32 : i32
  }
  func.func @transform_2(%arg0: i32, %arg1: i32) -> (i32, i32, i32) {
    %c0_i32 = arith.constant 0 : i32
    %c0_i32_0 = arith.constant 0 : i32
    return %arg0, %arg1, %c0_i32 : i32, i32, i32
  }
  func.func @transform_3(%arg0: i32, %arg1: i32) -> (i32, i32, i32) {
    %c0_i32 = arith.constant 0 : i32
    %c0_i32_0 = arith.constant 0 : i32
    return %arg0, %arg1, %c0_i32 : i32, i32, i32
  }
}

</mosaic_0001>

<llo_original>
// kernel: tpu_custom_call.1
$region0: #{tpu_custom_call.1}
  #allocation0 [shape = 'u32[]', space=smem, size = 0x4, offset = 0x4, fixed_abs, tag = 'smem constant byte address 0x4 - core index']
  #allocation1 [shape = 'u32[144,128]{1,0:T(1,128)}', space=vmem, size = 0x12000, scoped, tag = 'internal scratch']
  %s0 = inlined_call_operand.hbm [shape: f32[2], index: 0, kind: input, shape index: {}]
  %s1 = inlined_call_operand.vmem [shape: f32[2], index: 1, kind: input, shape index: {}]
  %s2 = inlined_call_operand.hbm [shape: f32[2,8,512], index: 2, kind: input, shape index: {}]
  %s3 = inlined_call_operand.hbm [shape: f32[2,8,512], index: 3, kind: output, shape index: {}]
  %s4 = sld [smem:[#allocation0]]
  $region65: #{tpu_custom_call.1} parent=0
    _
  %s6 = ssub.s32 1, %s4
  %s7 = scalar_select 0, %s6, %s4
  $region1: #{tpu_custom_call.1} parent=0
    #allocation2 [shape = 'u8[512]{0}', space=smem, size = 0x200, scoped, tag = 'input window, operand 0, single buffered']
    #allocation3 [shape = 's32[2]{0}', space=sflag, size = 0x8, scoped, tag = 'scoped memory for tpu_custom_call.1']
    #allocation4 [shape = 's32[2]{0}', space=sflag, size = 0x8, scoped, tag = 'scoped memory for tpu_custom_call.1']
    #allocation5 [shape = 's32[2]{0}', space=sflag, size = 0x8, scoped, tag = 'scoped memory for tpu_custom_call.1']
    #allocation6 [shape = 's32[2]{0}', space=sflag, size = 0x8, scoped, tag = 'scoped memory for tpu_custom_call.1']
    #allocation7 [shape = 'u8[512]{0}', space=smem, size = 0x200, scoped, tag = 'input window, operand 1, single buffered']
    #allocation8 [shape = 'u8[32768]{0}', space=vmem, size = 0x8000, scoped, tag = 'input window, operand 2']
    #allocation9 [shape = 'u8[32768]{0}', space=vmem, size = 0x8000, scoped, tag = 'output window, operand 0']
    %8 = vsyncpa [#allocation5], 0
    %9 = vsyncpa [#allocation6], 0
    %10 = vsyncpa [#allocation3], 0
    %s11 = scalar_lea.sflag [#allocation3], 1
    %12 = vsyncpa %s11, 0
    %13 = vsyncpa [#allocation4], 0
    %s14 = scalar_lea.sflag [#allocation4], 1
    %15 = vsyncpa %s14, 0
    loop: start=0, step=1, limit=4
    $region2: #{tpu_custom_call.1} parent=1 // loop_pre_header
      _
    $region3: #{tpu_custom_call.1} parent=1 // loop_header
      %s17 = sphi 0, %s21
      %p18 = scmp.ge.s32.totalorder %s17, 4
      %s24 = sphi 0, %s36
      %s25 = sphi 0, %s32
      %s26 = sphi 0, %s24
      %s27 = sphi 0, %s25
      %s28 = sphi 0, %s26
      %s29 = sphi 0, %s27
      %s37 = sphi 0, %s37
      %s39 = sphi 0, %s37
      %s40 = sphi 0, %s39
      %s54 = sphi 0, %s40
      %s58 = sphi 0, %s58
      %s60 = sphi 0, %s58
      %s61 = sphi 0, %s60
      %s75 = sphi 0, %s61
      %s83 = sphi 0, %s85
      %s86 = sphi 0, %s83
      %s87 = sphi 0, %s86
      %s103 = sphi 0, %s87
      %s111 = sphi 0, %s113
      %s114 = sphi 0, %s111
      %s115 = sphi 0, %s114
      %s131 = sphi 0, %s115
    $region4: #{tpu_custom_call.1} parent=1 // loop_header_branch
      %20 = sbr.rel (%p18) target = $region8
    $region5: #{tpu_custom_call.1} parent=1 // loop_body
      %s22 = ssub.s32 %s17, 1
      %s23 = ssub.s32 %s17, 2
      %s30 = sadd.s32 1, %s25
      %p31 = scmp.ge.s32.totalorder %s30, 1
      %s32 = scalar_select %p31, 0, %s30
      %s33 = sadd.s32 1, %s24
      %s34 = scalar_select %p31, %s33, %s24
      %p35 = scmp.ge.s32.totalorder %s34, 2
      %s36 = scalar_select %p35, 0, %s34
      %s38 = sadd.s32 %s37, 1
      %p41 = scmp.eq.s32.totalorder %s17, 1
      %p42 = scmp.ne.s32.totalorder %s37, %s39
      %p43 = scmp.eq.s32.totalorder %s17, 0
      %p44 = por %p42, %p43
      %p45 = scmp.ne.s32.totalorder %s37, %s39
      %p46 = scmp.eq.s32.totalorder %s22, 1
      %p47 = por %p45, %p46
      %p48 = scmp.ne.s32.totalorder %s39, %s40
      %p49 = scmp.eq.s32.totalorder %s22, 0
      %p50 = por %p48, %p49
      %p51 = scmp.ne.s32.totalorder %s39, %s40
      %p52 = scmp.eq.s32.totalorder %s23, 1
      %p53 = por %p51, %p52
      %p55 = scmp.ne.s32.totalorder %s40, %s54
      %p56 = scmp.eq.s32.totalorder %s23, 0
      %p57 = por %p55, %p56
      %s59 = sadd.s32 %s58, 1
      %p62 = scmp.eq.s32.totalorder %s17, 1
      %p63 = scmp.ne.s32.totalorder %s58, %s60
      %p64 = scmp.eq.s32.totalorder %s17, 0
      %p65 = por %p63, %p64
      %p66 = scmp.ne.s32.totalorder %s58, %s60
      %p67 = scmp.eq.s32.totalorder %s22, 1
      %p68 = por %p66, %p67
      %p69 = scmp.ne.s32.totalorder %s60, %s61
      %p70 = scmp.eq.s32.totalorder %s22, 0
      %p71 = por %p69, %p70
      %p72 = scmp.ne.s32.totalorder %s60, %s61
      %p73 = scmp.eq.s32.totalorder %s23, 1
      %p74 = por %p72, %p73
      %p76 = scmp.ne.s32.totalorder %s61, %s75
      %p77 = scmp.eq.s32.totalorder %s23, 0
      %p78 = por %p76, %p77
      %s79 = ssub.s32 %s24, %s36
      %s80 = ssub.s32 %s25, %s32
      %s81 = sor.u32 %s79, %s80
      %p82 = scmp.eq.s32.totalorder %s81, 0
      %s84 = sadd.s32 %s83, 1
      %s85 = scalar_select %p82, %s83, %s84
      %p88 = pneg %p82
      %p89 = scmp.eq.s32.totalorder %s17, 1
      %p90 = por %p88, %p89
      %p91 = scmp.ne.s32.totalorder %s83, %s86
      %p92 = scmp.eq.s32.totalorder %s17, 0
      %p93 = por %p91, %p92
      %p94 = scmp.ne.s32.totalorder %s83, %s86
      %p95 = scmp.eq.s32.totalorder %s22, 1
      %p96 = por %p94, %p95
      %p97 = scmp.ne.s32.totalorder %s86, %s87
      %p98 = scmp.eq.s32.totalorder %s22, 0
      %p99 = por %p97, %p98
      %p100 = scmp.ne.s32.totalorder %s86, %s87
      %p101 = scmp.eq.s32.totalorder %s23, 1
      %p102 = por %p100, %p101
      %p104 = scmp.ne.s32.totalorder %s87, %s103
      %p105 = scmp.eq.s32.totalorder %s23, 0
      %p106 = por %p104, %p105
      %s107 = ssub.s32 %s24, %s36
      %s108 = ssub.s32 %s25, %s32
      %s109 = sor.u32 %s107, %s108
      %p110 = scmp.eq.s32.totalorder %s109, 0
      %s112 = sadd.s32 %s111, 1
      %s113 = scalar_select %p110, %s111, %s112
      %p116 = pneg %p110
      %p117 = scmp.eq.s32.totalorder %s17, 1
      %p118 = por %p116, %p117
      %p119 = scmp.ne.s32.totalorder %s111, %s114
      %p120 = scmp.eq.s32.totalorder %s17, 0
      %p121 = por %p119, %p120
      %p122 = scmp.ne.s32.totalorder %s111, %s114
      %p123 = scmp.eq.s32.totalorder %s22, 1
      %p124 = por %p122, %p123
      %p125 = scmp.ne.s32.totalorder %s114, %s115
      %p126 = scmp.eq.s32.totalorder %s22, 0
      %p127 = por %p125, %p126
      %p128 = scmp.ne.s32.totalorder %s114, %s115
      %p129 = scmp.eq.s32.totalorder %s23, 1
      %p130 = por %p128, %p129
      %p132 = scmp.ne.s32.totalorder %s115, %s131
      %p133 = scmp.eq.s32.totalorder %s23, 0
      %p134 = por %p132, %p133
      %p135 = scmp.le.s32.totalorder 1, %s17
      %p136 = scmp.lt.s32.totalorder %s17, 3
      %p137 = pnand %p135, %p136
      %p138 = pneg %p137
      // Predicated region
      $region9: #{tpu_custom_call.1} parent=5 // pred_check
        _
      $region10: #{tpu_custom_call.1} parent=5 // pred_check_branch
        %140 = sbr.rel (%p137) target = $region12
      $region11: #{tpu_custom_call.1} parent=5 // pred_region
        %s141 = ssub.s32 %s17, 1
        // Predicated region
        $region13: #{tpu_custom_call.1} parent=11 // pred_check
          %p142 = pneg %p50
        $region14: #{tpu_custom_call.1} parent=11 // pred_check_branch
          %144 = sbr.rel (%p142) target = $region16
        $region15: #{tpu_custom_call.1} parent=11 // pred_region
          %s146 = ssub.s32 16, 16
          %147 = vsyncadd [#allocation5], %s146
          %150 = dma.hbm_to_smem %s0, 16, [#allocation2], [#allocation5]
        $region16: #{tpu_custom_call.1} parent=11 // pred_fallthru
          _
        // Predicated region
        $region17: #{tpu_custom_call.1} parent=11 // pred_check
          %p151 = pneg %p71
        $region18: #{tpu_custom_call.1} parent=11 // pred_check_branch
          %153 = sbr.rel (%p151) target = $region20
        $region19: #{tpu_custom_call.1} parent=11 // pred_region
          %s155 = ssub.s32 16, 16
          %156 = vsyncadd [#allocation6], %s155
          %s158 = sshll.u32 %s1, 4
          %s159 = int_to_ptr.vmem [resolvable:$true] %s158
          %161 = dma.vmem_to_smem %s159, 16, [#allocation7], [#allocation6]
        $region20: #{tpu_custom_call.1} parent=11 // pred_fallthru
          _
      $region12: #{tpu_custom_call.1} parent=5 // pred_fallthru
        _
      %p162 = scmp.lt.s32.totalorder %s17, 2
      // Predicated region
      $region21: #{tpu_custom_call.1} parent=5 // pred_check
        %p163 = pneg %p162
      $region22: #{tpu_custom_call.1} parent=5 // pred_check_branch
        %165 = sbr.rel (%p163) target = $region24
      $region23: #{tpu_custom_call.1} parent=5 // pred_region
        // Predicated region
        $region25: #{tpu_custom_call.1} parent=23 // pred_check
          %p166 = pneg %p93
        $region26: #{tpu_custom_call.1} parent=23 // pred_check_branch
          %168 = sbr.rel (%p166) target = $region28
        $region27: #{tpu_custom_call.1} parent=23 // pred_region
          %s169 = sand.u32 %s83, 1
          %s170 = scalar_lea.sflag [#allocation3], %s169
          %s171 = sand.u32 %s83, 1
          %s172 = smul.addr %s171, 32
          %s173 = scalar_lea.vmem [#allocation8], %s172
          %s175 = ssub.s32 512, 512
          %176 = vsyncadd %s170, %s175
          %s177 = smul.addr %s25, 4
          %s178 = smul.addr %s24, 4
          %s179 = sadd.s32 %s177, %s178
          %s180 = smul.addr %s179, 128
          %s181 = scalar_lea.hbm %s2, %s180
          %s183 = sshll.u32 %s173, 4
          %s184 = int_to_ptr.vmem [resolvable:$true] %s183
          %186 = dma.hbm_to_vmem [thread:$0]  %s181, 512, %s184, %s170
        $region28: #{tpu_custom_call.1} parent=23 // pred_fallthru
          _
      $region24: #{tpu_custom_call.1} parent=5 // pred_fallthru
        _
      %p187 = scmp.le.s32.totalorder 1, %s17
      %p188 = scmp.lt.s32.totalorder %s17, 3
      %p189 = pnand %p187, %p188
      %p190 = pneg %p189
      // Predicated region
      $region29: #{tpu_custom_call.1} parent=5 // pred_check
        _
      $region30: #{tpu_custom_call.1} parent=5 // pred_check_branch
        %192 = sbr.rel (%p189) target = $region32
      $region31: #{tpu_custom_call.1} parent=5 // pred_region
        %s193 = ssub.s32 %s17, 1
        // Predicated region
        $region33: #{tpu_custom_call.1} parent=31 // pred_check
          %p194 = pneg %p50
        $region34: #{tpu_custom_call.1} parent=31 // pred_check_branch
          %196 = sbr.rel (%p194) target = $region36
        $region35: #{tpu_custom_call.1} parent=31 // pred_region
          %197 = dma.done [#allocation5], 16
        $region36: #{tpu_custom_call.1} parent=31 // pred_fallthru
          _
        // Predicated region
        $region37: #{tpu_custom_call.1} parent=31 // pred_check
          %p198 = pneg %p71
        $region38: #{tpu_custom_call.1} parent=31 // pred_check_branch
          %200 = sbr.rel (%p198) target = $region40
        $region39: #{tpu_custom_call.1} parent=31 // pred_region
          %201 = dma.done [#allocation6], 16
        $region40: #{tpu_custom_call.1} parent=31 // pred_fallthru
          _
        %s202 = sand.u32 %s86, 1
        %s203 = scalar_lea.sflag [#allocation3], %s202
        %s204 = sand.u32 %s86, 1
        %s205 = smul.addr %s204, 32
        %s206 = scalar_lea.vmem [#allocation8], %s205
        // Predicated region
        $region41: #{tpu_custom_call.1} parent=31 // pred_check
          %p207 = pneg %p99
        $region42: #{tpu_custom_call.1} parent=31 // pred_check_branch
          %209 = sbr.rel (%p207) target = $region44
        $region43: #{tpu_custom_call.1} parent=31 // pred_region
          %210 = dma.done %s203, 512
        $region44: #{tpu_custom_call.1} parent=31 // pred_fallthru
          _
        %211 = sfence
        %p212 = pneg %p50
        %p213 = pneg %p47
        %p214 = pneg %p71
        %p215 = pneg %p68
        %s216 = sand.u32 %s86, 1
        %s217 = scalar_lea.sflag [#allocation3], %s216
        %s218 = sand.u32 %s86, 1
        %s219 = smul.addr %s218, 32
        %s220 = scalar_lea.vmem [#allocation8], %s219
        %p221 = pneg %p99
        %p222 = pneg %p96
        %p223 = pneg %p127
        %p224 = pneg %p124
        %s225 = sand.u32 %s114, 1
        %s226 = scalar_lea.sflag [#allocation4], %s225
        %s227 = sand.u32 %s114, 1
        %s228 = smul.addr %s227, 32
        %s229 = scalar_lea.vmem [#allocation9], %s228
        %s230 = sld [smem:[#allocation2 + %s26]]
        %s231 = sld [smem:[#allocation7 + %s26]]
        %v232 = vld [vmem:[%s206] sm:$0xff]
        %v233 = vld [vmem:[%s206 + $0x8] sm:$0xff]
        %v234 = vld [vmem:[%s206 + $0x10] sm:$0xff]
        %v235 = vld [vmem:[%s206 + $0x18] sm:$0xff]
        %p236 = scmp.eq.f32.partialorder %s230, 1.0
        // Predicated region
        $region45: #{tpu_custom_call.1} parent=31 // pred_check
          %p237 = pneg %p236
        $region46: #{tpu_custom_call.1} parent=31 // pred_check_branch
          %239 = sbr.rel (%p237) target = $region48
        $region47: #{tpu_custom_call.1} parent=31 // pred_region
          %v240 = vstv %s231
          %v241 = vmul.f32 %v240, %v232
          %v242 = vmul.f32 %v240, %v233
          %v243 = vmul.f32 %v240, %v234
          %v244 = vmul.f32 %v240, %v235
          %v245 = vmax.f32 %v241, 0.0
          %v246 = vmax.f32 %v242, 0.0
          %v247 = vmax.f32 %v243, 0.0
          %v248 = vmax.f32 %v244, 0.0
          %v249 = vmin.f32 %v245, 1.0
          %v250 = vmin.f32 %v246, 1.0
          %v251 = vmin.f32 %v247, 1.0
          %v252 = vmin.f32 %v248, 1.0
          %253 = vst [vmem:[%s229] sm:$0xff] %v249
          %254 = vst [vmem:[%s229 + $0x8] sm:$0xff] %v250
          %255 = vst [vmem:[%s229 + $0x10] sm:$0xff] %v251
          %256 = vst [vmem:[%s229 + $0x18] sm:$0xff] %v252
        $region48: #{tpu_custom_call.1} parent=31 // pred_fallthru
          _
        %p257 = scmp.ne.f32.partialorder %s230, 1.0
        // Predicated region
        $region49: #{tpu_custom_call.1} parent=31 // pred_check
          %p258 = pneg %p257
        $region50: #{tpu_custom_call.1} parent=31 // pred_check_branch
          %260 = sbr.rel (%p258) target = $region52
        $region51: #{tpu_custom_call.1} parent=31 // pred_region
          %v261 = vstv %s230
          %v262 = vpow.f32 %v232, %v261
          %v263 = vpow.f32 %v233, %v261
          %v264 = vpow.f32 %v234, %v261
          %v265 = vpow.f32 %v235, %v261
          %v266 = vstv %s231
          %v267 = vmul.f32 %v266, %v262
          %v268 = vmul.f32 %v266, %v263
          %v269 = vmul.f32 %v266, %v264
          %v270 = vmul.f32 %v266, %v265
          %v271 = vmax.f32 %v267, 0.0
          %v272 = vmax.f32 %v268, 0.0
          %v273 = vmax.f32 %v269, 0.0
          %v274 = vmax.f32 %v270, 0.0
          %v275 = vmin.f32 %v271, 1.0
          %v276 = vmin.f32 %v272, 1.0
          %v277 = vmin.f32 %v273, 1.0
          %v278 = vmin.f32 %v274, 1.0
          %279 = vst [vmem:[%s229] sm:$0xff] %v275
          %280 = vst [vmem:[%s229 + $0x8] sm:$0xff] %v276
          %281 = vst [vmem:[%s229 + $0x10] sm:$0xff] %v277
          %282 = vst [vmem:[%s229 + $0x18] sm:$0xff] %v278
        $region52: #{tpu_custom_call.1} parent=31 // pred_fallthru
          _
        %s283 = sand.u32 %s114, 1
        %s284 = scalar_lea.sflag [#allocation4], %s283
        %s285 = sand.u32 %s114, 1
        %s286 = smul.addr %s285, 32
        %s287 = scalar_lea.vmem [#allocation9], %s286
        // Predicated region
        $region53: #{tpu_custom_call.1} parent=31 // pred_check
          %p288 = pneg %p124
        $region54: #{tpu_custom_call.1} parent=31 // pred_check_branch
          %290 = sbr.rel (%p288) target = $region56
        $region55: #{tpu_custom_call.1} parent=31 // pred_region
          %s292 = ssub.s32 512, 512
          %293 = vsyncadd %s284, %s292
          %s294 = smul.addr %s27, 4
          %s295 = smul.addr %s26, 4
          %s296 = sadd.s32 %s294, %s295
          %s297 = smul.addr %s296, 128
          %s298 = scalar_lea.hbm %s3, %s297
          %s300 = sshll.u32 %s287, 4
          %s301 = int_to_ptr.vmem [resolvable:$true] %s300
          %303 = dma.vmem_to_hbm [thread:$0]  %s301, 512, %s298, %s284
        $region56: #{tpu_custom_call.1} parent=31 // pred_fallthru
          _
      $region32: #{tpu_custom_call.1} parent=5 // pred_fallthru
        _
      %p304 = scmp.le.s32.totalorder 2, %s17
      // Predicated region
      $region57: #{tpu_custom_call.1} parent=5 // pred_check
        %p305 = pneg %p304
      $region58: #{tpu_custom_call.1} parent=5 // pred_check_branch
        %307 = sbr.rel (%p305) target = $region60
      $region59: #{tpu_custom_call.1} parent=5 // pred_region
        %s308 = ssub.s32 %s17, 2
        // Predicated region
        $region61: #{tpu_custom_call.1} parent=59 // pred_check
          %p309 = pneg %p130
        $region62: #{tpu_custom_call.1} parent=59 // pred_check_branch
          %311 = sbr.rel (%p309) target = $region64
        $region63: #{tpu_custom_call.1} parent=59 // pred_region
          %s312 = sand.u32 %s115, 1
          %s313 = scalar_lea.sflag [#allocation4], %s312
          %s314 = sand.u32 %s115, 1
          %s315 = smul.addr %s314, 32
          %s316 = scalar_lea.vmem [#allocation9], %s315
          %317 = dma.done %s313, 512
        $region64: #{tpu_custom_call.1} parent=59 // pred_fallthru
          _
      $region60: #{tpu_custom_call.1} parent=5 // pred_fallthru
        _
    $region6: #{tpu_custom_call.1} parent=1 // loop_footer
      %s21 = sadd.s32 1, %s17
    $region7: #{tpu_custom_call.1} parent=1 // loop_footer_branch
      %16 = sbr.rel target = $region3
    $region8: #{tpu_custom_call.1} parent=1 // loop_exit
      _
    %318 = vsyncpa [#allocation3], 1
    %s319 = scalar_lea.sflag [#allocation3], 1
    %320 = vsyncpa %s319, 1
    %321 = vsyncpa [#allocation4], 1
    %s322 = scalar_lea.sflag [#allocation4], 1
    %323 = vsyncpa %s322, 1
    %324 = vsyncpa [#allocation5], 1
    %s325 = scalar_lea.sflag [#allocation5], 1
    %326 = vsyncpa %s325, 1
    %327 = vsyncpa [#allocation6], 1
    %s328 = scalar_lea.sflag [#allocation6], 1
    %329 = vsyncpa %s328, 1

</llo_original>
